<compile_context>
chip_gen: v7x
topology: tpu7x:2x2x1
jax: 0.10.0
libtpu: 0.0.40
codegen_flags: <defaults>
</compile_context>

<pallas_src>
import jax
import jax.numpy as jnp
from jax.experimental import pallas as pl
from jax.experimental.pallas import tpu as pltpu

_LW = 128                          # lane width
_SUB = 8                           # sublanes per f32 vreg
_X_BLOCK_BYTES = 6 * 1024 * 1024   # ~6 MiB of probabilities per grid step
_TS_CAP = 4096                     # bounds Mosaic full-tile temporaries
_VMEM_LIMIT = 48 * 1024 * 1024     # fits v7x (64 MiB phys); plenty on v5e/v6e


def _round_up(x, m):
    return ((x + m - 1) // m) * m


def _logloss_kernel(w_ref, x_ref, t_ref, num_ref, den_ref):
    # w_ref  : (C,)          f32 class weights in SMEM (scalar prefetch)
    # x_ref  : (C, TS, 128)  probabilities (f32 or bf16)
    # t_ref  : (TS, 128)     i32 class indices; -1 marks padded positions
    # num_ref: (8, 128)      f32 resident accumulator: sum w[t] * (-log p[t])
    # den_ref: (8, 128)      f32 resident accumulator: sum w[t]
    j = pl.program_id(2)

    @pl.when(j == 0)
    def _():
        num_ref[...] = jnp.zeros_like(num_ref)
        den_ref[...] = jnp.zeros_like(den_ref)

    t = t_ref[...]                                   # (TS, 128) i32
    num_classes = x_ref.shape[0]
    ts = t_ref.shape[0]

    # Select-based gather over the small static class axis.  Padding / over-read
    # tail positions have t == -1: they match no class, keep picked_p == 1
    # (log(1) == 0) and picked_w == 0, so they contribute exactly zero and any
    # garbage in an over-read x tail never enters a select.
    picked_p = (t < 0).astype(x_ref.dtype)           # 1.0 on padding, else 0.0
    picked_w = jnp.zeros(t.shape, jnp.float32)
    for c in range(num_classes):
        m = t == c
        picked_p = jnp.where(m, x_ref[c], picked_p)  # native dtype, per-class load
        picked_w = jnp.where(m, w_ref[c], picked_w)  # scalar splat from SMEM

    # Single upcast + single log per position.
    num_tile = picked_w * (-jnp.log(picked_p.astype(jnp.float32)))   # (TS, 128)

    # Fold sublane groups of 8 into the resident (8, 128) accumulators:
    # vreg-aligned retile + elementwise adds, no cross-lane work per step.
    num_ref[...] += jnp.sum(num_tile.reshape(ts // _SUB, _SUB, _LW), axis=0)
    den_ref[...] += jnp.sum(picked_w.reshape(ts // _SUB, _SUB, _LW), axis=0)


def log_loss(x_nchw, target_nhw, weights):
    """Weighted NLL of log(x).  x_nchw: (N,C,H,W) probabilities, target: (N,H,W) int."""
    N, C, H, W = x_nchw.shape
    HW = H * W

    x3 = x_nchw.reshape(N, C, HW)
    if x3.dtype not in (jnp.float32, jnp.bfloat16):
        x3 = x3.astype(jnp.float32)
    t2 = target_nhw.reshape(N, HW).astype(jnp.int32)
    w = jnp.asarray(weights, jnp.float32).reshape(C)

    # ---- Tile sizing: dtype-aware, ~6 MiB of probabilities per step. ----
    R = pl.cdiv(HW, _LW)                               # spatial rows of 128 lanes
    bytes_per_row = C * _LW * x3.dtype.itemsize
    ts_budget = max(16, (_X_BLOCK_BYTES // bytes_per_row) // 16 * 16)
    ts_target = min(_TS_CAP, ts_budget)
    # Rebalance TS against R: ragged sizes pad by <~16 rows/block, not a whole block.
    nblk = pl.cdiv(R, ts_target)
    TS = _round_up(pl.cdiv(R, nblk), 16)
    nblk = pl.cdiv(R, TS)

    # ---- Optional second parallel axis: split row blocks so both v7x TCs stay
    # busy when the batch axis alone cannot (odd / tiny N).  Harmless elsewhere.
    n_split = 2 if (N % 2 == 1 and nblk >= 2) else 1
    nblk_s = pl.cdiv(nblk, n_split)
    nblk_total = n_split * nblk_s

    # ---- Padding.  Targets are cheap (4 B/pos): pad with -1 to the grid extent.
    # Probabilities are padded only when unavoidable: to a 128-lane multiple
    # (needed for the free (R,128) retile), or up to one tile when the whole
    # spatial extent fits in a single block.  The tail of the last x block is
    # otherwise over-read; its targets are -1 so it contributes nothing.
    R_x = TS if nblk == 1 else R
    if R_x * _LW != HW:
        x3 = jnp.pad(x3, ((0, 0), (0, 0), (0, R_x * _LW - HW)))
    HWt = nblk_total * TS * _LW
    if HWt != HW:
        t2 = jnp.pad(t2, ((0, 0), (0, HWt - HW)), constant_values=-1)

    x4 = x3.reshape(N, C, R_x, _LW)
    t3 = t2.reshape(N, nblk_total * TS, _LW)

    # Row-block index maps.  The (at most one) excess block of an odd split is
    # clamped back in-bounds for x; its targets are all -1 -> zero contribution.
    if nblk_total > nblk:
        def x_map(n, s, j, w_ref):
            return (n, 0, jnp.minimum(s * nblk_s + j, nblk - 1), 0)
    else:
        def x_map(n, s, j, w_ref):
            return (n, 0, s * nblk_s + j, 0)

    def t_map(n, s, j, w_ref):
        return (n, s * nblk_s + j, 0)

    def o_map(n, s, j, w_ref):
        return (n, s, 0, 0)

    grid = (N, n_split, nblk_s)

    num_part, den_part = pl.pallas_call(
        _logloss_kernel,
        out_shape=(
            jax.ShapeDtypeStruct((N, n_split, _SUB, _LW), jnp.float32),
            jax.ShapeDtypeStruct((N, n_split, _SUB, _LW), jnp.float32),
        ),
        grid_spec=pltpu.PrefetchScalarGridSpec(
            num_scalar_prefetch=1,          # class weights -> SMEM
            grid=grid,
            in_specs=[
                pl.BlockSpec((None, C, TS, _LW), x_map),
                pl.BlockSpec((None, TS, _LW), t_map),
            ],
            out_specs=[
                pl.BlockSpec((None, None, _SUB, _LW), o_map),
                pl.BlockSpec((None, None, _SUB, _LW), o_map),
            ],
        ),
        compiler_params=pltpu.CompilerParams(
            dimension_semantics=("parallel", "parallel", "arbitrary"),
            vmem_limit_bytes=_VMEM_LIMIT,
        ),
    )(w, x4, t3)

    # Tiny final reduce + divide (N * n_split * 8 * 128 elements) in XLA.
    return jnp.sum(num_part) / jnp.sum(den_part)


def _reference(x_nchw, target_nhw, weights):
    # Pure-JAX reference of weighted NLLLoss(log(x)) with mean reduction.
    N, C, H, W = x_nchw.shape
    x2 = jnp.transpose(x_nchw, (0, 2, 3, 1)).reshape(-1, C)
    t2 = target_nhw.reshape(-1)
    logp = jnp.log(x2)
    picked = jnp.take_along_axis(logp, t2[:, None], axis=1)[:, 0]
    w_t = weights[t2]
    return jnp.sum(-picked * w_t) / jnp.sum(w_t)


if __name__ == "__main__":
    key = jax.random.PRNGKey(0)
    N, C, H, W = 2, 4, 16, 16

    k1, k2 = jax.random.split(key)
    logits = jax.random.normal(k1, (N, C, H, W), dtype=jnp.float32)
    probs = jax.nn.softmax(logits, axis=1)                # valid probabilities
    target = jax.random.randint(k2, (N, H, W), 0, C, dtype=jnp.int32)

    # Deterministic class weights (stand-in for the ctor's `weights` arg).
    weights = jnp.array([1.0, 2.0, 0.5, 1.5], dtype=jnp.float32)

    loss = jax.block_until_ready(log_loss(probs, target, weights))
    ref = jax.block_until_ready(_reference(probs, target, weights))

    assert jnp.allclose(loss, ref, rtol=1e-5, atol=1e-5), (loss, ref)
    print("KERNEL_OK")
</pallas_src>

<mosaic_0001>
module attributes {stable_mosaic.version = 11 : i64} {
  func.func @_logloss_kernel(%arg0: i32, %arg1: i32, %arg2: i32, %arg3: memref<4xf32, #tpu.memory_space<smem>>, %arg4: memref<1x4x16x128xf32, #tpu.memory_space<vmem>>, %arg5: memref<1x16x128xi32, #tpu.memory_space<vmem>>, %arg6: memref<1x1x8x128xf32, #tpu.memory_space<vmem>>, %arg7: memref<1x1x8x128xf32, #tpu.memory_space<vmem>>) attributes {dimension_semantics = [#tpu.dimension_semantics<parallel>, #tpu.dimension_semantics<parallel>, #tpu.dimension_semantics<arbitrary>], iteration_bounds = array<i64: 2, 1, 1>, scalar_prefetch = 1 : i64, scratch_operands = 0 : i64, tpu.core_type = #tpu.core_type<tc>, window_params = [{transform_indices = @transform_0, window_bounds = array<i64: 1, 4, 16, 128>}, {transform_indices = @transform_1, window_bounds = array<i64: 1, 16, 128>}, {transform_indices = @transform_2, window_bounds = array<i64: 1, 1, 8, 128>}, {transform_indices = @transform_3, window_bounds = array<i64: 1, 1, 8, 128>}]} {
    %c0_i32 = arith.constant 0 : i32
    %0 = arith.cmpi eq, %arg2, %c0_i32 : i32
    %1 = arith.extui %0 : i1 to i32
    %c0_i32_0 = arith.constant 0 : i32
    %2 = arith.cmpi ne, %1, %c0_i32_0 : i32
    scf.if %2 {
      %cst_41 = arith.constant 0.000000e+00 : f32
      %62 = vector.broadcast %cst_41 : f32 to vector<8x128xf32>
      %c0_42 = arith.constant 0 : index
      %c0_43 = arith.constant 0 : index
      %c0_44 = arith.constant 0 : index
      %c0_45 = arith.constant 0 : index
      %63 = vector.load %arg6[%c0_42, %c0_43, %c0_44, %c0_45] : memref<1x1x8x128xf32, #tpu.memory_space<vmem>>, vector<1x1x8x128xf32>
      %64 = vector.shape_cast %63 : vector<1x1x8x128xf32> to vector<8x128xf32>
      %65 = vector.shape_cast %62 : vector<8x128xf32> to vector<1x1x8x128xf32>
      tpu.vector_store %arg6[%c0_42, %c0_43, %c0_44, %c0_45], %65 {strides = array<i32>} : memref<1x1x8x128xf32, #tpu.memory_space<vmem>>, vector<1x1x8x128xf32>,
      %cst_46 = arith.constant 0.000000e+00 : f32
      %66 = vector.broadcast %cst_46 : f32 to vector<8x128xf32>
      %c0_47 = arith.constant 0 : index
      %c0_48 = arith.constant 0 : index
      %c0_49 = arith.constant 0 : index
      %c0_50 = arith.constant 0 : index
      %67 = vector.load %arg7[%c0_47, %c0_48, %c0_49, %c0_50] : memref<1x1x8x128xf32, #tpu.memory_space<vmem>>, vector<1x1x8x128xf32>
      %68 = vector.shape_cast %67 : vector<1x1x8x128xf32> to vector<8x128xf32>
      %69 = vector.shape_cast %66 : vector<8x128xf32> to vector<1x1x8x128xf32>
      tpu.vector_store %arg7[%c0_47, %c0_48, %c0_49, %c0_50], %69 {strides = array<i32>} : memref<1x1x8x128xf32, #tpu.memory_space<vmem>>, vector<1x1x8x128xf32>,
    } else {
    }
    %c0 = arith.constant 0 : index
    %c0_1 = arith.constant 0 : index
    %c0_2 = arith.constant 0 : index
    %3 = vector.load %arg5[%c0, %c0_1, %c0_2] : memref<1x16x128xi32, #tpu.memory_space<vmem>>, vector<1x16x128xi32>
    %4 = vector.shape_cast %3 : vector<1x16x128xi32> to vector<16x128xi32>
    %c0_i32_3 = arith.constant 0 : i32
    %5 = vector.broadcast %c0_i32_3 : i32 to vector<16x128xi32>
    %6 = arith.cmpi slt, %4, %5 : vector<16x128xi32>
    %7 = arith.extui %6 : vector<16x128xi1> to vector<16x128xi32>
    %8 = arith.sitofp %7 : vector<16x128xi32> to vector<16x128xf32>
    %cst = arith.constant 0.000000e+00 : f32
    %9 = vector.broadcast %cst : f32 to vector<16x128xf32>
    %c0_i32_4 = arith.constant 0 : i32
    %10 = vector.broadcast %c0_i32_4 : i32 to vector<16x128xi32>
    %11 = arith.cmpi eq, %4, %10 : vector<16x128xi32>
    %c0_5 = arith.constant 0 : index
    %c0_6 = arith.constant 0 : index
    %c0_7 = arith.constant 0 : index
    %c0_8 = arith.constant 0 : index
    %12 = vector.load %arg4[%c0_5, %c0_6, %c0_7, %c0_8] : memref<1x4x16x128xf32, #tpu.memory_space<vmem>>, vector<1x1x16x128xf32>
    %13 = vector.shape_cast %12 : vector<1x1x16x128xf32> to vector<16x128xf32>
    %14 = arith.select %11, %13, %8 : vector<16x128xi1>, vector<16x128xf32>
    %c0_9 = arith.constant 0 : index
    %15 = memref.load %arg3[%c0_9] : memref<4xf32, #tpu.memory_space<smem>>
    %16 = vector.broadcast %15 : f32 to vector<16x128xf32>
    %17 = arith.select %11, %16, %9 : vector<16x128xi1>, vector<16x128xf32>
    %c1_i32 = arith.constant 1 : i32
    %18 = vector.broadcast %c1_i32 : i32 to vector<16x128xi32>
    %19 = arith.cmpi eq, %4, %18 : vector<16x128xi32>
    %c0_10 = arith.constant 0 : index
    %c1 = arith.constant 1 : index
    %c0_11 = arith.constant 0 : index
    %c0_12 = arith.constant 0 : index
    %20 = vector.load %arg4[%c0_10, %c1, %c0_11, %c0_12] : memref<1x4x16x128xf32, #tpu.memory_space<vmem>>, vector<1x1x16x128xf32>
    %21 = vector.shape_cast %20 : vector<1x1x16x128xf32> to vector<16x128xf32>
    %22 = arith.select %19, %21, %14 : vector<16x128xi1>, vector<16x128xf32>
    %c1_13 = arith.constant 1 : index
    %23 = memref.load %arg3[%c1_13] : memref<4xf32, #tpu.memory_space<smem>>
    %24 = vector.broadcast %23 : f32 to vector<16x128xf32>
    %25 = arith.select %19, %24, %17 : vector<16x128xi1>, vector<16x128xf32>
    %c2_i32 = arith.constant 2 : i32
    %26 = vector.broadcast %c2_i32 : i32 to vector<16x128xi32>
    %27 = arith.cmpi eq, %4, %26 : vector<16x128xi32>
    %c0_14 = arith.constant 0 : index
    %c2 = arith.constant 2 : index
    %c0_15 = arith.constant 0 : index
    %c0_16 = arith.constant 0 : index
    %28 = vector.load %arg4[%c0_14, %c2, %c0_15, %c0_16] : memref<1x4x16x128xf32, #tpu.memory_space<vmem>>, vector<1x1x16x128xf32>
    %29 = vector.shape_cast %28 : vector<1x1x16x128xf32> to vector<16x128xf32>
    %30 = arith.select %27, %29, %22 : vector<16x128xi1>, vector<16x128xf32>
    %c2_17 = arith.constant 2 : index
    %31 = memref.load %arg3[%c2_17] : memref<4xf32, #tpu.memory_space<smem>>
    %32 = vector.broadcast %31 : f32 to vector<16x128xf32>
    %33 = arith.select %27, %32, %25 : vector<16x128xi1>, vector<16x128xf32>
    %c3_i32 = arith.constant 3 : i32
    %34 = vector.broadcast %c3_i32 : i32 to vector<16x128xi32>
    %35 = arith.cmpi eq, %4, %34 : vector<16x128xi32>
    %c0_18 = arith.constant 0 : index
    %c3 = arith.constant 3 : index
    %c0_19 = arith.constant 0 : index
    %c0_20 = arith.constant 0 : index
    %36 = vector.load %arg4[%c0_18, %c3, %c0_19, %c0_20] : memref<1x4x16x128xf32, #tpu.memory_space<vmem>>, vector<1x1x16x128xf32>
    %37 = vector.shape_cast %36 : vector<1x1x16x128xf32> to vector<16x128xf32>
    %38 = arith.select %35, %37, %30 : vector<16x128xi1>, vector<16x128xf32>
    %c3_21 = arith.constant 3 : index
    %39 = memref.load %arg3[%c3_21] : memref<4xf32, #tpu.memory_space<smem>>
    %40 = vector.broadcast %39 : f32 to vector<16x128xf32>
    %41 = arith.select %35, %40, %33 : vector<16x128xi1>, vector<16x128xf32>
    %42 = math.log %38 : vector<16x128xf32>
    %cst_22 = arith.constant 0.000000e+00 : f32
    %43 = vector.broadcast %cst_22 : f32 to vector<16x128xf32>
    %44 = arith.subf %43, %42 : vector<16x128xf32>
    %45 = arith.mulf %41, %44 : vector<16x128xf32>
    %c0_23 = arith.constant 0 : index
    %c0_24 = arith.constant 0 : index
    %c0_25 = arith.constant 0 : index
    %c0_26 = arith.constant 0 : index
    %46 = vector.load %arg6[%c0_23, %c0_24, %c0_25, %c0_26] : memref<1x1x8x128xf32, #tpu.memory_space<vmem>>, vector<1x1x8x128xf32>
    %47 = vector.shape_cast %46 : vector<1x1x8x128xf32> to vector<8x128xf32>
    %48 = vector.shape_cast %45 : vector<16x128xf32> to vector<2x8x128xf32>
    %cst_27 = arith.constant dense<0.000000e+00> : vector<8x128xf32>
    %49 = vector.multi_reduction <add>, %48, %cst_27 [0] : vector<2x8x128xf32> to vector<8x128xf32>
    %50 = arith.addf %47, %49 : vector<8x128xf32>
    %c0_28 = arith.constant 0 : index
    %c0_29 = arith.constant 0 : index
    %c0_30 = arith.constant 0 : index
    %c0_31 = arith.constant 0 : index
    %51 = vector.load %arg6[%c0_28, %c0_29, %c0_30, %c0_31] : memref<1x1x8x128xf32, #tpu.memory_space<vmem>>, vector<1x1x8x128xf32>
    %52 = vector.shape_cast %51 : vector<1x1x8x128xf32> to vector<8x128xf32>
    %53 = vector.shape_cast %50 : vector<8x128xf32> to vector<1x1x8x128xf32>
    tpu.vector_store %arg6[%c0_28, %c0_29, %c0_30, %c0_31], %53 {strides = array<i32>} : memref<1x1x8x128xf32, #tpu.memory_space<vmem>>, vector<1x1x8x128xf32>,
    %c0_32 = arith.constant 0 : index
    %c0_33 = arith.constant 0 : index
    %c0_34 = arith.constant 0 : index
    %c0_35 = arith.constant 0 : index
    %54 = vector.load %arg7[%c0_32, %c0_33, %c0_34, %c0_35] : memref<1x1x8x128xf32, #tpu.memory_space<vmem>>, vector<1x1x8x128xf32>
    %55 = vector.shape_cast %54 : vector<1x1x8x128xf32> to vector<8x128xf32>
    %56 = vector.shape_cast %41 : vector<16x128xf32> to vector<2x8x128xf32>
    %cst_36 = arith.constant dense<0.000000e+00> : vector<8x128xf32>
    %57 = vector.multi_reduction <add>, %56, %cst_36 [0] : vector<2x8x128xf32> to vector<8x128xf32>
    %58 = arith.addf %55, %57 : vector<8x128xf32>
    %c0_37 = arith.constant 0 : index
    %c0_38 = arith.constant 0 : index
    %c0_39 = arith.constant 0 : index
    %c0_40 = arith.constant 0 : index
    %59 = vector.load %arg7[%c0_37, %c0_38, %c0_39, %c0_40] : memref<1x1x8x128xf32, #tpu.memory_space<vmem>>, vector<1x1x8x128xf32>
    %60 = vector.shape_cast %59 : vector<1x1x8x128xf32> to vector<8x128xf32>
    %61 = vector.shape_cast %58 : vector<8x128xf32> to vector<1x1x8x128xf32>
    tpu.vector_store %arg7[%c0_37, %c0_38, %c0_39, %c0_40], %61 {strides = array<i32>} : memref<1x1x8x128xf32, #tpu.memory_space<vmem>>, vector<1x1x8x128xf32>,
    return
  }
  func.func @transform_0(%arg0: i32, %arg1: i32, %arg2: i32, %arg3: memref<4xf32, #tpu.memory_space<smem>>) -> (i32, i32, i32, i32) {
    %c1_i32 = arith.constant 1 : i32
    %0 = arith.muli %arg1, %c1_i32 : i32
    %1 = arith.addi %0, %arg2 : i32
    %c0_i32 = arith.constant 0 : i32
    %c0_i32_0 = arith.constant 0 : i32
    %c0_i32_1 = arith.constant 0 : i32
    return %arg0, %c0_i32, %1, %c0_i32_0 : i32, i32, i32, i32
  }
  func.func @transform_1(%arg0: i32, %arg1: i32, %arg2: i32, %arg3: memref<4xf32, #tpu.memory_space<smem>>) -> (i32, i32, i32) {
    %c1_i32 = arith.constant 1 : i32
    %0 = arith.muli %arg1, %c1_i32 : i32
    %1 = arith.addi %0, %arg2 : i32
    %c0_i32 = arith.constant 0 : i32
    %c0_i32_0 = arith.constant 0 : i32
    return %arg0, %1, %c0_i32 : i32, i32, i32
  }
  func.func @transform_2(%arg0: i32, %arg1: i32, %arg2: i32, %arg3: memref<4xf32, #tpu.memory_space<smem>>) -> (i32, i32, i32, i32) {
    %c0_i32 = arith.constant 0 : i32
    %c0_i32_0 = arith.constant 0 : i32
    %c0_i32_1 = arith.constant 0 : i32
    return %arg0, %arg1, %c0_i32, %c0_i32_0 : i32, i32, i32, i32
  }
  func.func @transform_3(%arg0: i32, %arg1: i32, %arg2: i32, %arg3: memref<4xf32, #tpu.memory_space<smem>>) -> (i32, i32, i32, i32) {
    %c0_i32 = arith.constant 0 : i32
    %c0_i32_0 = arith.constant 0 : i32
    %c0_i32_1 = arith.constant 0 : i32
    return %arg0, %arg1, %c0_i32, %c0_i32_0 : i32, i32, i32, i32
  }
}

</mosaic_0001>

<llo_original>
// kernel: tpu_custom_call.1
$region0: #{tpu_custom_call.1}
  #allocation0 [shape = 'u32[]', space=smem, size = 0x4, offset = 0x4, fixed_abs, tag = 'smem constant byte address 0x4 - core index']
  #allocation1 [shape = 'u32[144,128]{1,0:T(1,128)}', space=vmem, size = 0x12000, scoped, tag = 'internal scratch']
  #allocation2 [shape = 's32[1]{0}', space=sflag, size = 0x4, scoped, tag = 'scoped memory for tpu_custom_call.1']
  #allocation3 [shape = 'u8[512]{0}', space=smem, size = 0x200, scoped, tag = 'prefetched SMEM operand 0']
  %s0 = inlined_call_operand.hbm [shape: f32[4], index: 0, kind: input, shape index: {}]
  %s1 = inlined_call_operand.hbm [shape: f32[2,4,16,128], index: 1, kind: input, shape index: {}]
  %s2 = inlined_call_operand.hbm [shape: s32[2,16,128], index: 2, kind: input, shape index: {}]
  %s3 = inlined_call_operand.hbm [shape: f32[2,1,8,128], index: 3, kind: output, shape index: {0}]
  %s4 = inlined_call_operand.hbm [shape: f32[2,1,8,128], index: 4, kind: output, shape index: {1}]
  %5 = xla_tuple %s3, %s4
  %s6 = sld [smem:[#allocation0]]
  $region61: #{tpu_custom_call.1} parent=0
    _
  %s8 = ssub.s32 1, %s6
  %s9 = scalar_select 0, %s8, %s6
  %11 = dma.hbm_to_smem %s0, 16, [#allocation3], [#allocation2]
  %12 = dma.done [#allocation2], 16
  %13 = sfence
  $region1: #{tpu_custom_call.1} parent=0
    #allocation4 [shape = 'u8[65536]{0}', space=vmem, size = 0x10000, scoped, tag = 'input window, operand 1']
    #allocation5 [shape = 's32[2]{0}', space=sflag, size = 0x8, scoped, tag = 'scoped memory for tpu_custom_call.1']
    #allocation6 [shape = 's32[2]{0}', space=sflag, size = 0x8, scoped, tag = 'scoped memory for tpu_custom_call.1']
    #allocation7 [shape = 'u8[16384]{0}', space=vmem, size = 0x4000, scoped, tag = 'input window, operand 2']
    #allocation8 [shape = 's32[2]{0}', space=sflag, size = 0x8, scoped, tag = 'scoped memory for tpu_custom_call.1']
    #allocation9 [shape = 'u8[8192]{0}', space=vmem, size = 0x2000, scoped, tag = 'output window, operand 0']
    #allocation10 [shape = 'u8[8192]{0}', space=vmem, size = 0x2000, scoped, tag = 'output window, operand 1']
    #allocation11 [shape = 's32[2]{0}', space=sflag, size = 0x8, scoped, tag = 'scoped memory for tpu_custom_call.1']
    %14 = vsyncpa [#allocation5], 0
    %s15 = scalar_lea.sflag [#allocation5], 1
    %16 = vsyncpa %s15, 0
    %17 = vsyncpa [#allocation8], 0
    %s18 = scalar_lea.sflag [#allocation8], 1
    %19 = vsyncpa %s18, 0
    %20 = vsyncpa [#allocation6], 0
    %s21 = scalar_lea.sflag [#allocation6], 1
    %22 = vsyncpa %s21, 0
    %23 = vsyncpa [#allocation11], 0
    %s24 = scalar_lea.sflag [#allocation11], 1
    %25 = vsyncpa %s24, 0
    loop: start=0, step=1, limit=4
    $region2: #{tpu_custom_call.1} parent=1 // loop_pre_header
      _
    $region3: #{tpu_custom_call.1} parent=1 // loop_header
      %s27 = sphi 0, %s31
      %p28 = scmp.ge.s32.totalorder %s27, 4
      %s34 = sphi 0, %s53
      %s35 = sphi 0, %s49
      %s36 = sphi 0, %s45
      %s37 = sphi 0, %s34
      %s38 = sphi 0, %s35
      %s39 = sphi 0, %s36
      %s40 = sphi 0, %s37
      %s41 = sphi 0, %s38
      %s42 = sphi 0, %s39
      %s60 = sphi 0, %s62
      %s63 = sphi 0, %s60
      %s64 = sphi 0, %s63
      %s80 = sphi 0, %s64
      %s90 = sphi 0, %s92
      %s93 = sphi 0, %s90
      %s94 = sphi 0, %s93
      %s110 = sphi 0, %s94
      %s118 = sphi 0, %s120
      %s121 = sphi 0, %s118
      %s122 = sphi 0, %s121
      %s138 = sphi 0, %s122
      %s146 = sphi 0, %s148
      %s149 = sphi 0, %s146
      %s150 = sphi 0, %s149
      %s166 = sphi 0, %s150
    $region4: #{tpu_custom_call.1} parent=1 // loop_header_branch
      %30 = sbr.rel (%p28) target = $region8
    $region5: #{tpu_custom_call.1} parent=1 // loop_body
      %s32 = ssub.s32 %s27, 1
      %s33 = ssub.s32 %s27, 2
      %s43 = sadd.s32 1, %s36
      %p44 = scmp.ge.s32.totalorder %s43, 1
      %s45 = scalar_select %p44, 0, %s43
      %s46 = sadd.s32 1, %s35
      %s47 = scalar_select %p44, %s46, %s35
      %p48 = scmp.ge.s32.totalorder %s47, 1
      %s49 = scalar_select %p48, 0, %s47
      %s50 = sadd.s32 1, %s34
      %s51 = scalar_select %p48, %s50, %s34
      %p52 = scmp.ge.s32.totalorder %s51, 2
      %s53 = scalar_select %p52, 0, %s51
      %s54 = sadd.s32 %s35, %s36
      %s55 = sadd.s32 %s49, %s45
      %s56 = ssub.s32 %s34, %s53
      %s57 = ssub.s32 %s54, %s55
      %s58 = sor.u32 %s56, %s57
      %p59 = scmp.eq.s32.totalorder %s58, 0
      %s61 = sadd.s32 %s60, 1
      %s62 = scalar_select %p59, %s60, %s61
      %p65 = pneg %p59
      %p66 = scmp.eq.s32.totalorder %s27, 1
      %p67 = por %p65, %p66
      %p68 = scmp.ne.s32.totalorder %s60, %s63
      %p69 = scmp.eq.s32.totalorder %s27, 0
      %p70 = por %p68, %p69
      %p71 = scmp.ne.s32.totalorder %s60, %s63
      %p72 = scmp.eq.s32.totalorder %s32, 1
      %p73 = por %p71, %p72
      %p74 = scmp.ne.s32.totalorder %s63, %s64
      %p75 = scmp.eq.s32.totalorder %s32, 0
      %p76 = por %p74, %p75
      %p77 = scmp.ne.s32.totalorder %s63, %s64
      %p78 = scmp.eq.s32.totalorder %s33, 1
      %p79 = por %p77, %p78
      %p81 = scmp.ne.s32.totalorder %s64, %s80
      %p82 = scmp.eq.s32.totalorder %s33, 0
      %p83 = por %p81, %p82
      %s84 = sadd.s32 %s35, %s36
      %s85 = sadd.s32 %s49, %s45
      %s86 = ssub.s32 %s34, %s53
      %s87 = ssub.s32 %s84, %s85
      %s88 = sor.u32 %s86, %s87
      %p89 = scmp.eq.s32.totalorder %s88, 0
      %s91 = sadd.s32 %s90, 1
      %s92 = scalar_select %p89, %s90, %s91
      %p95 = pneg %p89
      %p96 = scmp.eq.s32.totalorder %s27, 1
      %p97 = por %p95, %p96
      %p98 = scmp.ne.s32.totalorder %s90, %s93
      %p99 = scmp.eq.s32.totalorder %s27, 0
      %p100 = por %p98, %p99
      %p101 = scmp.ne.s32.totalorder %s90, %s93
      %p102 = scmp.eq.s32.totalorder %s32, 1
      %p103 = por %p101, %p102
      %p104 = scmp.ne.s32.totalorder %s93, %s94
      %p105 = scmp.eq.s32.totalorder %s32, 0
      %p106 = por %p104, %p105
      %p107 = scmp.ne.s32.totalorder %s93, %s94
      %p108 = scmp.eq.s32.totalorder %s33, 1
      %p109 = por %p107, %p108
      %p111 = scmp.ne.s32.totalorder %s94, %s110
      %p112 = scmp.eq.s32.totalorder %s33, 0
      %p113 = por %p111, %p112
      %s114 = ssub.s32 %s34, %s53
      %s115 = ssub.s32 %s35, %s49
      %s116 = sor.u32 %s114, %s115
      %p117 = scmp.eq.s32.totalorder %s116, 0
      %s119 = sadd.s32 %s118, 1
      %s120 = scalar_select %p117, %s118, %s119
      %p123 = pneg %p117
      %p124 = scmp.eq.s32.totalorder %s27, 1
      %p125 = por %p123, %p124
      %p126 = scmp.ne.s32.totalorder %s118, %s121
      %p127 = scmp.eq.s32.totalorder %s27, 0
      %p128 = por %p126, %p127
      %p129 = scmp.ne.s32.totalorder %s118, %s121
      %p130 = scmp.eq.s32.totalorder %s32, 1
      %p131 = por %p129, %p130
      %p132 = scmp.ne.s32.totalorder %s121, %s122
      %p133 = scmp.eq.s32.totalorder %s32, 0
      %p134 = por %p132, %p133
      %p135 = scmp.ne.s32.totalorder %s121, %s122
      %p136 = scmp.eq.s32.totalorder %s33, 1
      %p137 = por %p135, %p136
      %p139 = scmp.ne.s32.totalorder %s122, %s138
      %p140 = scmp.eq.s32.totalorder %s33, 0
      %p141 = por %p139, %p140
      %s142 = ssub.s32 %s34, %s53
      %s143 = ssub.s32 %s35, %s49
      %s144 = sor.u32 %s142, %s143
      %p145 = scmp.eq.s32.totalorder %s144, 0
      %s147 = sadd.s32 %s146, 1
      %s148 = scalar_select %p145, %s146, %s147
      %p151 = pneg %p145
      %p152 = scmp.eq.s32.totalorder %s27, 1
      %p153 = por %p151, %p152
      %p154 = scmp.ne.s32.totalorder %s146, %s149
      %p155 = scmp.eq.s32.totalorder %s27, 0
      %p156 = por %p154, %p155
      %p157 = scmp.ne.s32.totalorder %s146, %s149
      %p158 = scmp.eq.s32.totalorder %s32, 1
      %p159 = por %p157, %p158
      %p160 = scmp.ne.s32.totalorder %s149, %s150
      %p161 = scmp.eq.s32.totalorder %s32, 0
      %p162 = por %p160, %p161
      %p163 = scmp.ne.s32.totalorder %s149, %s150
      %p164 = scmp.eq.s32.totalorder %s33, 1
      %p165 = por %p163, %p164
      %p167 = scmp.ne.s32.totalorder %s150, %s166
      %p168 = scmp.eq.s32.totalorder %s33, 0
      %p169 = por %p167, %p168
      %p170 = scmp.le.s32.totalorder 1, %s27
      %p171 = scmp.lt.s32.totalorder %s27, 3
      %p172 = pnand %p170, %p171
      %p173 = pneg %p172
      // Predicated region
      $region9: #{tpu_custom_call.1} parent=5 // pred_check
        _
      $region10: #{tpu_custom_call.1} parent=5 // pred_check_branch
        %175 = sbr.rel (%p172) target = $region12
      $region11: #{tpu_custom_call.1} parent=5 // pred_region
        %s176 = ssub.s32 %s27, 1
      $region12: #{tpu_custom_call.1} parent=5 // pred_fallthru
        _
      %p177 = scmp.lt.s32.totalorder %s27, 2
      // Predicated region
      $region13: #{tpu_custom_call.1} parent=5 // pred_check
        %p178 = pneg %p177
      $region14: #{tpu_custom_call.1} parent=5 // pred_check_branch
        %180 = sbr.rel (%p178) target = $region16
      $region15: #{tpu_custom_call.1} parent=5 // pred_region
        // Predicated region
        $region17: #{tpu_custom_call.1} parent=15 // pred_check
          %p181 = pneg %p70
        $region18: #{tpu_custom_call.1} parent=15 // pred_check_branch
          %183 = sbr.rel (%p181) target = $region20
        $region19: #{tpu_custom_call.1} parent=15 // pred_region
          %s184 = sand.u32 %s60, 1
          %s185 = scalar_lea.sflag [#allocation5], %s184
          %s186 = sand.u32 %s60, 1
          %s187 = smul.addr %s186, 64
          %s188 = scalar_lea.vmem [#allocation4], %s187
          %s189 = sadd.s32 %s35, %s36
          %s190 = smul.u32 2, %s189
          %s192 = ssub.s32 1024, 1024
          %193 = vsyncadd %s185, %s192
          %s194 = smul.addr %s34, 8
          %s195 = sadd.s32 %s190, %s194
          %s196 = smul.addr %s195, 128
          %s197 = scalar_lea.hbm %s1, %s196
          %s198 = sshll.u32 %s188, 4
          %s199 = int_to_ptr.vmem [resolvable:$true] %s198
          %204 = dma.hbm_to_vmem [thread:$0]  %s197, 1024, %s199, %s185, 128, 128, 8
        $region20: #{tpu_custom_call.1} parent=15 // pred_fallthru
          _
        // Predicated region
        $region21: #{tpu_custom_call.1} parent=15 // pred_check
          %p205 = pneg %p100
        $region22: #{tpu_custom_call.1} parent=15 // pred_check_branch
          %207 = sbr.rel (%p205) target = $region24
        $region23: #{tpu_custom_call.1} parent=15 // pred_region
          %s208 = sand.u32 %s90, 1
          %s209 = scalar_lea.sflag [#allocation8], %s208
          %s210 = sand.u32 %s90, 1
          %s211 = smul.addr %s210, 16
          %s212 = scalar_lea.vmem [#allocation7], %s211
          %s213 = sadd.s32 %s35, %s36
          %s214 = smul.u32 2, %s213
          %s216 = ssub.s32 256, 256
          %217 = vsyncadd %s209, %s216
          %s218 = smul.addr %s34, 2
          %s219 = sadd.s32 %s214, %s218
          %s220 = smul.addr %s219, 128
          %s221 = scalar_lea.hbm %s2, %s220
          %s222 = sshll.u32 %s212, 4
          %s223 = int_to_ptr.vmem [resolvable:$true] %s222
          %228 = dma.hbm_to_vmem [thread:$0]  %s221, 256, %s223, %s209, 128, 128, 8
        $region24: #{tpu_custom_call.1} parent=15 // pred_fallthru
          _
      $region16: #{tpu_custom_call.1} parent=5 // pred_fallthru
        _
      %p229 = scmp.le.s32.totalorder 1, %s27
      %p230 = scmp.lt.s32.totalorder %s27, 3
      %p231 = pnand %p229, %p230
      %p232 = pneg %p231
      // Predicated region
      $region25: #{tpu_custom_call.1} parent=5 // pred_check
        _
      $region26: #{tpu_custom_call.1} parent=5 // pred_check_branch
        %234 = sbr.rel (%p231) target = $region28
      $region27: #{tpu_custom_call.1} parent=5 // pred_region
        %s235 = ssub.s32 %s27, 1
        %s236 = sand.u32 %s63, 1
        %s237 = scalar_lea.sflag [#allocation5], %s236
        %s238 = sand.u32 %s63, 1
        %s239 = smul.addr %s238, 64
        %s240 = scalar_lea.vmem [#allocation4], %s239
        // Predicated region
        $region29: #{tpu_custom_call.1} parent=27 // pred_check
          %p241 = pneg %p76
        $region30: #{tpu_custom_call.1} parent=27 // pred_check_branch
          %243 = sbr.rel (%p241) target = $region32
        $region31: #{tpu_custom_call.1} parent=27 // pred_region
          %244 = dma.done %s237, 1024
        $region32: #{tpu_custom_call.1} parent=27 // pred_fallthru
          _
        %s245 = sand.u32 %s93, 1
        %s246 = scalar_lea.sflag [#allocation8], %s245
        %s247 = sand.u32 %s93, 1
        %s248 = smul.addr %s247, 16
        %s249 = scalar_lea.vmem [#allocation7], %s248
        // Predicated region
        $region33: #{tpu_custom_call.1} parent=27 // pred_check
          %p250 = pneg %p106
        $region34: #{tpu_custom_call.1} parent=27 // pred_check_branch
          %252 = sbr.rel (%p250) target = $region36
        $region35: #{tpu_custom_call.1} parent=27 // pred_region
          %253 = dma.done %s246, 256
        $region36: #{tpu_custom_call.1} parent=27 // pred_fallthru
          _
        %s254 = sand.u32 %s63, 1
        %s255 = scalar_lea.sflag [#allocation5], %s254
        %s256 = sand.u32 %s63, 1
        %s257 = smul.addr %s256, 64
        %s258 = scalar_lea.vmem [#allocation4], %s257
        %p259 = pneg %p76
        %p260 = pneg %p73
        %s261 = sand.u32 %s93, 1
        %s262 = scalar_lea.sflag [#allocation8], %s261
        %s263 = sand.u32 %s93, 1
        %s264 = smul.addr %s263, 16
        %s265 = scalar_lea.vmem [#allocation7], %s264
        %p266 = pneg %p106
        %p267 = pneg %p103
        %p268 = pneg %p134
        %p269 = pneg %p131
        %s270 = sand.u32 %s121, 1
        %s271 = scalar_lea.sflag [#allocation6], %s270
        %s272 = sand.u32 %s121, 1
        %s273 = smul.addr %s272, 8
        %s274 = scalar_lea.vmem [#allocation9], %s273
        %p275 = pneg %p162
        %p276 = pneg %p159
        %s277 = sand.u32 %s149, 1
        %s278 = scalar_lea.sflag [#allocation11], %s277
        %s279 = sand.u32 %s149, 1
        %s280 = smul.addr %s279, 8
        %s281 = scalar_lea.vmem [#allocation10], %s280
        %s282 = sadd.s32 %s38, %s39
        %s283 = smul.u32 2, %s282
        %s284 = sadd.s32 %s38, %s39
        %s285 = smul.u32 2, %s284
        %p286 = scmp.eq.s32.totalorder %s39, 0
        // Predicated region
        $region37: #{tpu_custom_call.1} parent=27 // pred_check
          %p287 = pneg %p286
        $region38: #{tpu_custom_call.1} parent=27 // pred_check_branch
          %289 = sbr.rel (%p287) target = $region40
        $region39: #{tpu_custom_call.1} parent=27 // pred_region
          %290 = vst [vmem:[%s274] sm:$0xff] 0.0
          %291 = vst [vmem:[%s281] sm:$0xff] 0.0
        $region40: #{tpu_custom_call.1} parent=27 // pred_fallthru
          _
        %v292 = vld [vmem:[%s249] sm:$0xff]
        %v293 = vld [vmem:[%s249 + $0x8] sm:$0xff]
        %vm294 = vcmp.lt.s32.totalorder %v292, 0
        %vm295 = vcmp.lt.s32.totalorder %v293, 0
        %v296 = vsel %vm294, 1, 0
        %v297 = vsel %vm295, 1, 0
        %v298 = vcvt.s32.f32 %v296
        %v299 = vcvt.s32.f32 %v297
        %vm300 = vcmp.eq.s32.totalorder %v292, 0
        %vm301 = vcmp.eq.s32.totalorder %v293, 0
        %v302 = vld [vmem:[%s240] sm:$0xff]
        %v303 = vld [vmem:[%s240 + $0x8] sm:$0xff]
        %v304 = vsel %vm300, %v302, %v298
        %v305 = vsel %vm301, %v303, %v299
        %s306 = sld [smem:[#allocation3]]
        %v307 = vstv %s306
        %v308 = vsel %vm300, %v307, 0.0
        %v309 = vsel %vm301, %v307, 0.0
        %vm310 = vcmp.eq.s32.totalorder %v292, 1
        %vm311 = vcmp.eq.s32.totalorder %v293, 1
        %s312 = scalar_lea.vmem %s240, 16 [#allocation4]
        %v313 = vld [vmem:[%s312] sm:$0xff]
        %v314 = vld [vmem:[%s312 + $0x8] sm:$0xff]
        %v315 = vsel %vm310, %v313, %v304
        %v316 = vsel %vm311, %v314, %v305
        %s317 = sld [smem:[#allocation3 + $0x1]]
        %v318 = vstv %s317
        %v319 = vsel %vm310, %v318, %v308
        %v320 = vsel %vm311, %v318, %v309
        %vm321 = vcmp.eq.s32.totalorder %v292, 2
        %vm322 = vcmp.eq.s32.totalorder %v293, 2
        %s323 = scalar_lea.vmem %s240, 32 [#allocation4]
        %v324 = vld [vmem:[%s323] sm:$0xff]
        %v325 = vld [vmem:[%s323 + $0x8] sm:$0xff]
        %v326 = vsel %vm321, %v324, %v315
        %v327 = vsel %vm322, %v325, %v316
        %s328 = sld [smem:[#allocation3 + $0x2]]
        %v329 = vstv %s328
        %v330 = vsel %vm321, %v329, %v319
        %v331 = vsel %vm322, %v329, %v320
        %vm332 = vcmp.eq.s32.totalorder %v292, 3
        %vm333 = vcmp.eq.s32.totalorder %v293, 3
        %s334 = scalar_lea.vmem %s240, 48 [#allocation4]
        %v335 = vld [vmem:[%s334] sm:$0xff]
        %v336 = vld [vmem:[%s334 + $0x8] sm:$0xff]
        %v337 = vsel %vm332, %v335, %v326
        %v338 = vsel %vm333, %v336, %v327
        %s339 = sld [smem:[#allocation3 + $0x3]]
        %v340 = vstv %s339
        %v341 = vsel %vm332, %v340, %v330
        %v342 = vsel %vm333, %v340, %v331
        %v343 = vlog2.pop %v337
        %v344 = vmul.f32 %v343, 0.6931472
        %v345 = vlog2.pop %v338
        %v346 = vmul.f32 %v345, 0.6931472
        %v347 = vsub.f32 0.0, %v344
        %v348 = vsub.f32 0.0, %v346
        %v349 = vmul.f32 %v341, %v347
        %v350 = vmul.f32 %v342, %v348
        %v351 = vld [vmem:[%s274] sm:$0xff]
        %v352 = vadd.f32 %v349, %v350
        %v353 = vadd.f32 %v351, %v352
        %354 = vst [vmem:[%s274] sm:$0xff] %v353
        %v355 = vld [vmem:[%s281] sm:$0xff]
        %v356 = vadd.f32 %v341, %v342
        %v357 = vadd.f32 %v355, %v356
        %358 = vst [vmem:[%s281] sm:$0xff] %v357
        %s359 = sand.u32 %s121, 1
        %s360 = scalar_lea.sflag [#allocation6], %s359
        %s361 = sand.u32 %s121, 1
        %s362 = smul.addr %s361, 8
        %s363 = scalar_lea.vmem [#allocation9], %s362
        %s364 = sand.u32 %s149, 1
        %s365 = scalar_lea.sflag [#allocation11], %s364
        %s366 = sand.u32 %s149, 1
        %s367 = smul.addr %s366, 8
        %s368 = scalar_lea.vmem [#allocation10], %s367
        // Predicated region
        $region41: #{tpu_custom_call.1} parent=27 // pred_check
          %p369 = pneg %p131
        $region42: #{tpu_custom_call.1} parent=27 // pred_check_branch
          %371 = sbr.rel (%p369) target = $region44
        $region43: #{tpu_custom_call.1} parent=27 // pred_region
          %s373 = ssub.s32 128, 128
          %374 = vsyncadd %s360, %s373
          %s375 = sadd.s32 %s38, %s37
          %s376 = smul.addr %s375, 128
          %s377 = scalar_lea.hbm %s3, %s376
          %s379 = sshll.u32 %s363, 4
          %s380 = int_to_ptr.vmem [resolvable:$true] %s379
          %382 = dma.vmem_to_hbm [thread:$0]  %s380, 128, %s377, %s360
        $region44: #{tpu_custom_call.1} parent=27 // pred_fallthru
          _
        // Predicated region
        $region45: #{tpu_custom_call.1} parent=27 // pred_check
          %p383 = pneg %p159
        $region46: #{tpu_custom_call.1} parent=27 // pred_check_branch
          %385 = sbr.rel (%p383) target = $region48
        $region47: #{tpu_custom_call.1} parent=27 // pred_region
          %s387 = ssub.s32 128, 128
          %388 = vsyncadd %s365, %s387
          %s389 = sadd.s32 %s38, %s37
          %s390 = smul.addr %s389, 128
          %s391 = scalar_lea.hbm %s4, %s390
          %s393 = sshll.u32 %s368, 4
          %s394 = int_to_ptr.vmem [resolvable:$true] %s393
          %396 = dma.vmem_to_hbm [thread:$0]  %s394, 128, %s391, %s365
        $region48: #{tpu_custom_call.1} parent=27 // pred_fallthru
          _
      $region28: #{tpu_custom_call.1} parent=5 // pred_fallthru
        _
      %p397 = scmp.le.s32.totalorder 2, %s27
      // Predicated region
      $region49: #{tpu_custom_call.1} parent=5 // pred_check
        %p398 = pneg %p397
      $region50: #{tpu_custom_call.1} parent=5 // pred_check_branch
        %400 = sbr.rel (%p398) target = $region52
      $region51: #{tpu_custom_call.1} parent=5 // pred_region
        %s401 = ssub.s32 %s27, 2
        // Predicated region
        $region53: #{tpu_custom_call.1} parent=51 // pred_check
          %p402 = pneg %p137
        $region54: #{tpu_custom_call.1} parent=51 // pred_check_branch
          %404 = sbr.rel (%p402) target = $region56
        $region55: #{tpu_custom_call.1} parent=51 // pred_region
          %s405 = sand.u32 %s122, 1
          %s406 = scalar_lea.sflag [#allocation6], %s405
          %s407 = sand.u32 %s122, 1
          %s408 = smul.addr %s407, 8
          %s409 = scalar_lea.vmem [#allocation9], %s408
          %410 = dma.done %s406, 128
        $region56: #{tpu_custom_call.1} parent=51 // pred_fallthru
          _
        // Predicated region
        $region57: #{tpu_custom_call.1} parent=51 // pred_check
          %p411 = pneg %p165
        $region58: #{tpu_custom_call.1} parent=51 // pred_check_branch
          %413 = sbr.rel (%p411) target = $region60
        $region59: #{tpu_custom_call.1} parent=51 // pred_region
          %s414 = sand.u32 %s150, 1
          %s415 = scalar_lea.sflag [#allocation11], %s414
          %s416 = sand.u32 %s150, 1
          %s417 = smul.addr %s416, 8
          %s418 = scalar_lea.vmem [#allocation10], %s417
          %419 = dma.done %s415, 128
        $region60: #{tpu_custom_call.1} parent=51 // pred_fallthru
          _
      $region52: #{tpu_custom_call.1} parent=5 // pred_fallthru
        _
    $region6: #{tpu_custom_call.1} parent=1 // loop_footer
      %s31 = sadd.s32 1, %s27
    $region7: #{tpu_custom_call.1} parent=1 // loop_footer_branch
      %26 = sbr.rel target = $region3
    $region8: #{tpu_custom_call.1} parent=1 // loop_exit
      _
    %420 = vsyncpa [#allocation5], 1
    %s421 = scalar_lea.sflag [#allocation5], 1
    %422 = vsyncpa %s421, 1
    %423 = vsyncpa [#allocation8], 1
    %s424 = scalar_lea.sflag [#allocation8], 1
    %425 = vsyncpa %s424, 1
    %426 = vsyncpa [#allocation6], 1
    %s427 = scalar_lea.sflag [#allocation6], 1
    %428 = vsyncpa %s427, 1
    %429 = vsyncpa [#allocation11], 1
    %s430 = scalar_lea.sflag [#allocation11], 1
    %431 = vsyncpa %s430, 1

</llo_original>
